<compile_context>
chip_gen: v6e
topology: v6e:2x2x1
jax: 0.10.0
libtpu: 0.0.40
codegen_flags: <defaults>
</compile_context>

<pallas_src>
import functools

import jax
import jax.numpy as jnp
from jax.experimental import pallas as pl
from jax.experimental.pallas import tpu as pltpu

# ---- model hyper-parameters (mirror Model.__init__ defaults) ----
STATE_F = 32            # flatten_size (flat vector state -> Identity preprocess)
NODE = 128              # node
ACTION_N = 4            # action_size[0]
CAT_N = 51              # categorial_bar_n
CAT_PAD = 64            # per-action lane-aligned pad (51 -> 64)
OUT_PAD = ACTION_N * CAT_PAD   # 256 = 2 full 128-lane vregs
LANES_PER_HALF = 128    # process the output in 128-lane (full vreg) halves
NEG_INF = -1e30         # padded bias value -> exp() == 0, softmax unchanged


def _c51_kernel(x_ref, w1_ref, b1_ref, w2_ref, b2_ref, w3_ref, b3_ref,
                out_ref, *, action_n, cat_pad):
    tb = x_ref.shape[0]

    # MLP hot path: bf16 MXU inputs, f32 accumulation, f32 elementwise (v5e-safe).
    x = x_ref[...]                                                    # (TB, F) bf16
    h = jnp.dot(x, w1_ref[...], preferred_element_type=jnp.float32)
    h = jnp.maximum(h + b1_ref[...], 0.0)                             # (TB, node) f32
    h = jnp.dot(h.astype(jnp.bfloat16), w2_ref[...],
                preferred_element_type=jnp.float32)
    h = jnp.maximum(h + b2_ref[...], 0.0)                             # (TB, node) f32
    h = h.astype(jnp.bfloat16)

    # Last layer + softmax in 128-lane halves: each half is 2 actions x 64
    # padded categories. Stores are full-vreg, 128-aligned and lane-dense;
    # exp / multiply run over full 128-lane vregs. Padded columns carry bias
    # -1e30 -> exp(...) == 0, never the row max, so softmax is unchanged.
    segs_per_half = LANES_PER_HALF // cat_pad                         # 2
    n_halves = (action_n * cat_pad) // LANES_PER_HALF                 # 2
    for half in range(n_halves):
        c0 = half * LANES_PER_HALF
        logits = jnp.dot(h, w3_ref[:, c0:c0 + LANES_PER_HALF],
                         preferred_element_type=jnp.float32)
        logits = logits + b3_ref[:, c0:c0 + LANES_PER_HALF]           # (TB, 128) f32

        maxes = [jnp.max(logits[:, s * cat_pad:(s + 1) * cat_pad],
                         axis=-1, keepdims=True)
                 for s in range(segs_per_half)]                       # 2 x (TB, 1)
        m_full = jnp.concatenate(
            [jnp.broadcast_to(m, (tb, cat_pad)) for m in maxes], axis=-1)
        e = jnp.exp(logits - m_full)                                  # one 128-lane exp

        # Exact f32 reciprocal of each segment sum (approx recip broke the
        # sum-to-1 guarantee); broadcast back to full lanes, one multiply.
        inv = [1.0 / jnp.sum(e[:, s * cat_pad:(s + 1) * cat_pad],
                             axis=-1, keepdims=True)
               for s in range(segs_per_half)]
        inv_full = jnp.concatenate(
            [jnp.broadcast_to(v, (tb, cat_pad)) for v in inv], axis=-1)

        out_ref[:, c0:c0 + LANES_PER_HALF] = (e * inv_full).astype(out_ref.dtype)


def c51_forward(x, w1, b1, w2, b2, w3, b3, *, block_b=512,
                out_dtype=jnp.bfloat16):
    """x: (B, F) f32; weights in nn.Linear layout transposed: w (in, out), b (1, out).

    Returns (B, ACTION_N, CAT_N) probabilities in `out_dtype` (bf16 by default;
    internal math is f32, only the final store is quantized).
    """
    B, F = x.shape
    node = w1.shape[1]
    assert w3.shape == (node, ACTION_N * CAT_N)

    # --- weight layout plumbing (wrapper-side, free relative to kernel) ---
    # Pad the last layer 204 -> 256 columns (64 per action). Padded weight
    # columns are 0; padded bias columns are -1e30 so softmax is unaffected.
    w3p = jnp.pad(
        w3.reshape(node, ACTION_N, CAT_N),
        ((0, 0), (0, 0), (0, CAT_PAD - CAT_N)),
    ).reshape(node, OUT_PAD)
    b3p = jnp.pad(
        b3.reshape(1, ACTION_N, CAT_N),
        ((0, 0), (0, 0), (0, CAT_PAD - CAT_N)),
        constant_values=NEG_INF,
    ).reshape(1, OUT_PAD)

    # bf16 weights + activations (halve HBM DMA; MXU-native); biases stay f32.
    w1b = w1.astype(jnp.bfloat16)
    w2b = w2.astype(jnp.bfloat16)
    w3b = w3p.astype(jnp.bfloat16)
    b1f = b1.astype(jnp.float32)
    b2f = b2.astype(jnp.float32)
    b3f = b3p.astype(jnp.float32)
    xb = x.astype(jnp.bfloat16)

    # --- batch tiling ---
    # Large tiles amortize per-grid-step overhead; when B > block_b the grid
    # has >= 2 steps so the "parallel" axis shards across v7x's 2 TensorCores.
    b_pad8 = ((B + 7) // 8) * 8
    tb = min(block_b, b_pad8)
    Bp = pl.cdiv(b_pad8, tb) * tb
    if Bp != B:
        xb = jnp.pad(xb, ((0, Bp - B), (0, 0)))
    grid = (Bp // tb,)

    kernel = functools.partial(_c51_kernel, action_n=ACTION_N, cat_pad=CAT_PAD)

    def resident(shape):  # weights: constant block index -> stay VMEM-resident
        return pl.BlockSpec(shape, lambda i: (0, 0))

    out = pl.pallas_call(
        kernel,
        out_shape=jax.ShapeDtypeStruct((Bp, OUT_PAD), out_dtype),
        grid=grid,
        in_specs=[
            pl.BlockSpec((tb, F), lambda i: (i, 0)),       # activations: tiled over B
            resident((F, node)), resident((1, node)),
            resident((node, node)), resident((1, node)),
            resident((node, OUT_PAD)), resident((1, OUT_PAD)),
        ],
        out_specs=pl.BlockSpec((tb, OUT_PAD), lambda i: (i, 0)),
        compiler_params=pltpu.CompilerParams(
            dimension_semantics=("parallel",)),
    )(xb, w1b, b1f, w2b, b2f, w3b, b3f)

    # Free wrapper-side view back to the torch output layout (B, A, C).
    return out[:B].reshape(B, ACTION_N, CAT_PAD)[:, :, :CAT_N]


def c51_reference(x, w1, b1, w2, b2, w3, b3):
    # Same numerics as the kernel (bf16 MXU inputs, f32 accumulation/softmax),
    # minus the final bf16 output quantization.
    w1b, w2b, w3b = (w.astype(jnp.bfloat16) for w in (w1, w2, w3))
    h = jnp.dot(x.astype(jnp.bfloat16), w1b,
                preferred_element_type=jnp.float32) + b1
    h = jnp.maximum(h, 0.0)
    h = jnp.dot(h.astype(jnp.bfloat16), w2b,
                preferred_element_type=jnp.float32) + b2
    h = jnp.maximum(h, 0.0)
    q = jnp.dot(h.astype(jnp.bfloat16), w3b,
                preferred_element_type=jnp.float32) + b3
    q = q.reshape(-1, ACTION_N, CAT_N)
    return jax.nn.softmax(q, axis=2)


def init_params(key):
    ks = jax.random.split(key, 6)
    # Deterministic synthetic init (shapes match nn.Linear weights, stored transposed).
    def lin(kw, kb, fan_in, fan_out):
        bound = 1.0 / jnp.sqrt(fan_in)
        w = jax.random.uniform(kw, (fan_in, fan_out), jnp.float32, -bound, bound)
        b = jax.random.uniform(kb, (1, fan_out), jnp.float32, -bound, bound)
        return w, b
    w1, b1 = lin(ks[0], ks[1], STATE_F, NODE)
    w2, b2 = lin(ks[2], ks[3], NODE, NODE)
    w3, b3 = lin(ks[4], ks[5], NODE, ACTION_N * CAT_N)
    return w1, b1, w2, b2, w3, b3


if __name__ == "__main__":
    key = jax.random.PRNGKey(0)
    kx, kp = jax.random.split(key)
    B = 8
    x = jax.random.normal(kx, (B, STATE_F), jnp.float32)
    params = init_params(kp)

    out = c51_forward(x, *params)
    out = jax.block_until_ready(out)

    ref = c51_reference(x, *params)
    assert out.shape == (B, ACTION_N, CAT_N)

    # Output is bf16-quantized (perf); probabilities here are ~0.02, so the
    # per-element quantization error is ~1e-4 and the 51-term sum error is
    # well under 5e-3. Internal softmax uses an exact reciprocal, so each
    # distribution sums to 1 up to that quantization.
    out_f32 = out.astype(jnp.float32)
    assert jnp.allclose(out_f32, ref, atol=2e-3, rtol=2e-2), "mismatch vs reference"
    assert jnp.allclose(out_f32.sum(-1), jnp.ones((B, ACTION_N)), atol=5e-3)

    print("KERNEL_OK")
</pallas_src>

<mosaic_0001>
module attributes {stable_mosaic.version = 11 : i64} {
  func.func @_c51_kernel(%arg0: i32, %arg1: memref<8x32xbf16, #tpu.memory_space<vmem>>, %arg2: memref<32x128xbf16, #tpu.memory_space<vmem>>, %arg3: memref<1x128xf32, #tpu.memory_space<vmem>>, %arg4: memref<128x128xbf16, #tpu.memory_space<vmem>>, %arg5: memref<1x128xf32, #tpu.memory_space<vmem>>, %arg6: memref<128x256xbf16, #tpu.memory_space<vmem>>, %arg7: memref<1x256xf32, #tpu.memory_space<vmem>>, %arg8: memref<8x256xbf16, #tpu.memory_space<vmem>>) attributes {dimension_semantics = [#tpu.dimension_semantics<parallel>], iteration_bounds = array<i64: 1>, scalar_prefetch = 0 : i64, scratch_operands = 0 : i64, tpu.core_type = #tpu.core_type<tc>, window_params = [{transform_indices = @transform_0, window_bounds = array<i64: 8, 32>}, {pipeline_mode = #tpu.pipeline_mode<synchronous>, transform_indices = @transform_1, window_bounds = array<i64: 32, 128>}, {pipeline_mode = #tpu.pipeline_mode<synchronous>, transform_indices = @transform_2, window_bounds = array<i64: 1, 128>}, {pipeline_mode = #tpu.pipeline_mode<synchronous>, transform_indices = @transform_3, window_bounds = array<i64: 128, 128>}, {pipeline_mode = #tpu.pipeline_mode<synchronous>, transform_indices = @transform_4, window_bounds = array<i64: 1, 128>}, {pipeline_mode = #tpu.pipeline_mode<synchronous>, transform_indices = @transform_5, window_bounds = array<i64: 128, 256>}, {pipeline_mode = #tpu.pipeline_mode<synchronous>, transform_indices = @transform_6, window_bounds = array<i64: 1, 256>}, {transform_indices = @transform_7, window_bounds = array<i64: 8, 256>}]} {
    %c0 = arith.constant 0 : index
    %c0_0 = arith.constant 0 : index
    %0 = vector.load %arg1[%c0, %c0_0] : memref<8x32xbf16, #tpu.memory_space<vmem>>, vector<8x32xbf16>
    %c0_1 = arith.constant 0 : index
    %c0_2 = arith.constant 0 : index
    %1 = vector.load %arg2[%c0_1, %c0_2] : memref<32x128xbf16, #tpu.memory_space<vmem>>, vector<32x128xbf16>
    %cst = arith.constant dense<0.000000e+00> : vector<8x128xf32>
    %2 = tpu.matmul %0, %1, %cst {dimension_numbers = #tpu.dot_dimension_numbers<[1], [0], [0], [1], [0, 0, 1, 1], [], []>} : vector<8x32xbf16>, vector<32x128xbf16>, vector<8x128xf32> -> vector<8x128xf32>
    %c0_3 = arith.constant 0 : index
    %c0_4 = arith.constant 0 : index
    %3 = vector.load %arg3[%c0_3, %c0_4] : memref<1x128xf32, #tpu.memory_space<vmem>>, vector<1x128xf32>
    %4 = vector.broadcast %3 : vector<1x128xf32> to vector<8x128xf32>
    %5 = arith.addf %2, %4 : vector<8x128xf32>
    %cst_5 = arith.constant 0.000000e+00 : f32
    %6 = vector.broadcast %cst_5 : f32 to vector<8x128xf32>
    %7 = arith.maximumf %5, %6 : vector<8x128xf32>
    %8 = arith.truncf %7 : vector<8x128xf32> to vector<8x128xbf16>
    %c0_6 = arith.constant 0 : index
    %c0_7 = arith.constant 0 : index
    %9 = vector.load %arg4[%c0_6, %c0_7] : memref<128x128xbf16, #tpu.memory_space<vmem>>, vector<128x128xbf16>
    %cst_8 = arith.constant dense<0.000000e+00> : vector<8x128xf32>
    %10 = tpu.matmul %8, %9, %cst_8 {dimension_numbers = #tpu.dot_dimension_numbers<[1], [0], [0], [1], [0, 0, 1, 1], [], []>} : vector<8x128xbf16>, vector<128x128xbf16>, vector<8x128xf32> -> vector<8x128xf32>
    %c0_9 = arith.constant 0 : index
    %c0_10 = arith.constant 0 : index
    %11 = vector.load %arg5[%c0_9, %c0_10] : memref<1x128xf32, #tpu.memory_space<vmem>>, vector<1x128xf32>
    %12 = vector.broadcast %11 : vector<1x128xf32> to vector<8x128xf32>
    %13 = arith.addf %10, %12 : vector<8x128xf32>
    %cst_11 = arith.constant 0.000000e+00 : f32
    %14 = vector.broadcast %cst_11 : f32 to vector<8x128xf32>
    %15 = arith.maximumf %13, %14 : vector<8x128xf32>
    %16 = arith.truncf %15 : vector<8x128xf32> to vector<8x128xbf16>
    %c0_12 = arith.constant 0 : index
    %c0_13 = arith.constant 0 : index
    %17 = vector.load %arg6[%c0_12, %c0_13] : memref<128x256xbf16, #tpu.memory_space<vmem>>, vector<128x128xbf16>
    %cst_14 = arith.constant dense<0.000000e+00> : vector<8x128xf32>
    %18 = tpu.matmul %16, %17, %cst_14 {dimension_numbers = #tpu.dot_dimension_numbers<[1], [0], [0], [1], [0, 0, 1, 1], [], []>} : vector<8x128xbf16>, vector<128x128xbf16>, vector<8x128xf32> -> vector<8x128xf32>
    %c0_15 = arith.constant 0 : index
    %c0_16 = arith.constant 0 : index
    %19 = vector.load %arg7[%c0_15, %c0_16] : memref<1x256xf32, #tpu.memory_space<vmem>>, vector<1x128xf32>
    %20 = vector.broadcast %19 : vector<1x128xf32> to vector<8x128xf32>
    %21 = arith.addf %18, %20 : vector<8x128xf32>
    %22 = vector.extract_strided_slice %21 {offsets = [0, 0], sizes = [8, 64], strides = [1, 1]} : vector<8x128xf32> to vector<8x64xf32>
    %cst_17 = arith.constant dense<0xFF800000> : vector<8xf32>
    %23 = vector.multi_reduction <maximumf>, %22, %cst_17 [1] : vector<8x64xf32> to vector<8xf32>
    %24 = vector.shape_cast %23 : vector<8xf32> to vector<8x1xf32>
    %25 = vector.extract_strided_slice %21 {offsets = [0, 64], sizes = [8, 64], strides = [1, 1]} : vector<8x128xf32> to vector<8x64xf32>
    %cst_18 = arith.constant dense<0xFF800000> : vector<8xf32>
    %26 = vector.multi_reduction <maximumf>, %25, %cst_18 [1] : vector<8x64xf32> to vector<8xf32>
    %27 = vector.shape_cast %26 : vector<8xf32> to vector<8x1xf32>
    %28 = vector.shape_cast %24 : vector<8x1xf32> to vector<8x1xf32>
    %29 = vector.broadcast %28 : vector<8x1xf32> to vector<8x64xf32>
    %30 = vector.shape_cast %27 : vector<8x1xf32> to vector<8x1xf32>
    %31 = vector.broadcast %30 : vector<8x1xf32> to vector<8x64xf32>
    %32 = tpu.concatenate %29, %31 in 1 : vector<8x64xf32>, vector<8x64xf32> -> vector<8x128xf32>
    %33 = arith.subf %21, %32 : vector<8x128xf32>
    %34 = math.exp %33 : vector<8x128xf32>
    %35 = vector.extract_strided_slice %34 {offsets = [0, 0], sizes = [8, 64], strides = [1, 1]} : vector<8x128xf32> to vector<8x64xf32>
    %cst_19 = arith.constant dense<0.000000e+00> : vector<8xf32>
    %36 = vector.multi_reduction <add>, %35, %cst_19 [1] : vector<8x64xf32> to vector<8xf32>
    %37 = vector.shape_cast %36 : vector<8xf32> to vector<8x1xf32>
    %cst_20 = arith.constant 1.000000e+00 : f32
    %38 = vector.broadcast %cst_20 : f32 to vector<8x1xf32>
    %39 = arith.divf %38, %37 : vector<8x1xf32>
    %40 = vector.extract_strided_slice %34 {offsets = [0, 64], sizes = [8, 64], strides = [1, 1]} : vector<8x128xf32> to vector<8x64xf32>
    %cst_21 = arith.constant dense<0.000000e+00> : vector<8xf32>
    %41 = vector.multi_reduction <add>, %40, %cst_21 [1] : vector<8x64xf32> to vector<8xf32>
    %42 = vector.shape_cast %41 : vector<8xf32> to vector<8x1xf32>
    %cst_22 = arith.constant 1.000000e+00 : f32
    %43 = vector.broadcast %cst_22 : f32 to vector<8x1xf32>
    %44 = arith.divf %43, %42 : vector<8x1xf32>
    %45 = vector.shape_cast %39 : vector<8x1xf32> to vector<8x1xf32>
    %46 = vector.broadcast %45 : vector<8x1xf32> to vector<8x64xf32>
    %47 = vector.shape_cast %44 : vector<8x1xf32> to vector<8x1xf32>
    %48 = vector.broadcast %47 : vector<8x1xf32> to vector<8x64xf32>
    %49 = tpu.concatenate %46, %48 in 1 : vector<8x64xf32>, vector<8x64xf32> -> vector<8x128xf32>
    %50 = arith.mulf %34, %49 : vector<8x128xf32>
    %51 = arith.truncf %50 : vector<8x128xf32> to vector<8x128xbf16>
    %c0_23 = arith.constant 0 : index
    %c0_24 = arith.constant 0 : index
    %52 = vector.load %arg8[%c0_23, %c0_24] : memref<8x256xbf16, #tpu.memory_space<vmem>>, vector<8x128xbf16>
    tpu.vector_store %arg8[%c0_23, %c0_24], %51 {strides = array<i32>} : memref<8x256xbf16, #tpu.memory_space<vmem>>, vector<8x128xbf16>,
    %c0_25 = arith.constant 0 : index
    %c128 = arith.constant 128 : index
    %53 = vector.load %arg6[%c0_25, %c128] : memref<128x256xbf16, #tpu.memory_space<vmem>>, vector<128x128xbf16>
    %cst_26 = arith.constant dense<0.000000e+00> : vector<8x128xf32>
    %54 = tpu.matmul %16, %53, %cst_26 {dimension_numbers = #tpu.dot_dimension_numbers<[1], [0], [0], [1], [0, 0, 1, 1], [], []>} : vector<8x128xbf16>, vector<128x128xbf16>, vector<8x128xf32> -> vector<8x128xf32>
    %c0_27 = arith.constant 0 : index
    %c128_28 = arith.constant 128 : index
    %55 = vector.load %arg7[%c0_27, %c128_28] : memref<1x256xf32, #tpu.memory_space<vmem>>, vector<1x128xf32>
    %56 = vector.broadcast %55 : vector<1x128xf32> to vector<8x128xf32>
    %57 = arith.addf %54, %56 : vector<8x128xf32>
    %58 = vector.extract_strided_slice %57 {offsets = [0, 0], sizes = [8, 64], strides = [1, 1]} : vector<8x128xf32> to vector<8x64xf32>
    %cst_29 = arith.constant dense<0xFF800000> : vector<8xf32>
    %59 = vector.multi_reduction <maximumf>, %58, %cst_29 [1] : vector<8x64xf32> to vector<8xf32>
    %60 = vector.shape_cast %59 : vector<8xf32> to vector<8x1xf32>
    %61 = vector.extract_strided_slice %57 {offsets = [0, 64], sizes = [8, 64], strides = [1, 1]} : vector<8x128xf32> to vector<8x64xf32>
    %cst_30 = arith.constant dense<0xFF800000> : vector<8xf32>
    %62 = vector.multi_reduction <maximumf>, %61, %cst_30 [1] : vector<8x64xf32> to vector<8xf32>
    %63 = vector.shape_cast %62 : vector<8xf32> to vector<8x1xf32>
    %64 = vector.shape_cast %60 : vector<8x1xf32> to vector<8x1xf32>
    %65 = vector.broadcast %64 : vector<8x1xf32> to vector<8x64xf32>
    %66 = vector.shape_cast %63 : vector<8x1xf32> to vector<8x1xf32>
    %67 = vector.broadcast %66 : vector<8x1xf32> to vector<8x64xf32>
    %68 = tpu.concatenate %65, %67 in 1 : vector<8x64xf32>, vector<8x64xf32> -> vector<8x128xf32>
    %69 = arith.subf %57, %68 : vector<8x128xf32>
    %70 = math.exp %69 : vector<8x128xf32>
    %71 = vector.extract_strided_slice %70 {offsets = [0, 0], sizes = [8, 64], strides = [1, 1]} : vector<8x128xf32> to vector<8x64xf32>
    %cst_31 = arith.constant dense<0.000000e+00> : vector<8xf32>
    %72 = vector.multi_reduction <add>, %71, %cst_31 [1] : vector<8x64xf32> to vector<8xf32>
    %73 = vector.shape_cast %72 : vector<8xf32> to vector<8x1xf32>
    %cst_32 = arith.constant 1.000000e+00 : f32
    %74 = vector.broadcast %cst_32 : f32 to vector<8x1xf32>
    %75 = arith.divf %74, %73 : vector<8x1xf32>
    %76 = vector.extract_strided_slice %70 {offsets = [0, 64], sizes = [8, 64], strides = [1, 1]} : vector<8x128xf32> to vector<8x64xf32>
    %cst_33 = arith.constant dense<0.000000e+00> : vector<8xf32>
    %77 = vector.multi_reduction <add>, %76, %cst_33 [1] : vector<8x64xf32> to vector<8xf32>
    %78 = vector.shape_cast %77 : vector<8xf32> to vector<8x1xf32>
    %cst_34 = arith.constant 1.000000e+00 : f32
    %79 = vector.broadcast %cst_34 : f32 to vector<8x1xf32>
    %80 = arith.divf %79, %78 : vector<8x1xf32>
    %81 = vector.shape_cast %75 : vector<8x1xf32> to vector<8x1xf32>
    %82 = vector.broadcast %81 : vector<8x1xf32> to vector<8x64xf32>
    %83 = vector.shape_cast %80 : vector<8x1xf32> to vector<8x1xf32>
    %84 = vector.broadcast %83 : vector<8x1xf32> to vector<8x64xf32>
    %85 = tpu.concatenate %82, %84 in 1 : vector<8x64xf32>, vector<8x64xf32> -> vector<8x128xf32>
    %86 = arith.mulf %70, %85 : vector<8x128xf32>
    %87 = arith.truncf %86 : vector<8x128xf32> to vector<8x128xbf16>
    %c0_35 = arith.constant 0 : index
    %c128_36 = arith.constant 128 : index
    %88 = vector.load %arg8[%c0_35, %c128_36] : memref<8x256xbf16, #tpu.memory_space<vmem>>, vector<8x128xbf16>
    tpu.vector_store %arg8[%c0_35, %c128_36], %87 {strides = array<i32>} : memref<8x256xbf16, #tpu.memory_space<vmem>>, vector<8x128xbf16>,
    return
  }
  func.func @transform_0(%arg0: i32) -> (i32, i32) {
    %c0_i32 = arith.constant 0 : i32
    %c0_i32_0 = arith.constant 0 : i32
    return %arg0, %c0_i32 : i32, i32
  }
  func.func @transform_1(%arg0: i32) -> (i32, i32) {
    %c0_i32 = arith.constant 0 : i32
    %c0_i32_0 = arith.constant 0 : i32
    %c0_i32_1 = arith.constant 0 : i32
    return %c0_i32, %c0_i32_0 : i32, i32
  }
  func.func @transform_2(%arg0: i32) -> (i32, i32) {
    %c0_i32 = arith.constant 0 : i32
    %c0_i32_0 = arith.constant 0 : i32
    %c0_i32_1 = arith.constant 0 : i32
    return %c0_i32, %c0_i32_0 : i32, i32
  }
  func.func @transform_3(%arg0: i32) -> (i32, i32) {
    %c0_i32 = arith.constant 0 : i32
    %c0_i32_0 = arith.constant 0 : i32
    %c0_i32_1 = arith.constant 0 : i32
    return %c0_i32, %c0_i32_0 : i32, i32
  }
  func.func @transform_4(%arg0: i32) -> (i32, i32) {
    %c0_i32 = arith.constant 0 : i32
    %c0_i32_0 = arith.constant 0 : i32
    %c0_i32_1 = arith.constant 0 : i32
    return %c0_i32, %c0_i32_0 : i32, i32
  }
  func.func @transform_5(%arg0: i32) -> (i32, i32) {
    %c0_i32 = arith.constant 0 : i32
    %c0_i32_0 = arith.constant 0 : i32
    %c0_i32_1 = arith.constant 0 : i32
    return %c0_i32, %c0_i32_0 : i32, i32
  }
  func.func @transform_6(%arg0: i32) -> (i32, i32) {
    %c0_i32 = arith.constant 0 : i32
    %c0_i32_0 = arith.constant 0 : i32
    %c0_i32_1 = arith.constant 0 : i32
    return %c0_i32, %c0_i32_0 : i32, i32
  }
  func.func @transform_7(%arg0: i32) -> (i32, i32) {
    %c0_i32 = arith.constant 0 : i32
    %c0_i32_0 = arith.constant 0 : i32
    return %arg0, %c0_i32 : i32, i32
  }
}

</mosaic_0001>

<llo_original>
// kernel: tpu_custom_call.1
$region0: #{tpu_custom_call.1}
  #allocation0 [shape = 'u32[]', space=smem, size = 0x4, offset = 0x4, fixed_abs, tag = 'smem constant byte address 0x4 - core index']
  #allocation1 [shape = 'u32[144,128]{1,0:T(1,128)}', space=vmem, size = 0x12000, scoped, tag = 'internal scratch']
  %s0 = inlined_call_operand.hbm [shape: bf16[8,32], index: 0, kind: input, shape index: {}]
  %s1 = inlined_call_operand.hbm [shape: bf16[32,128], index: 1, kind: input, shape index: {}]
  %s2 = inlined_call_operand.vmem [shape: f32[1,128], index: 2, kind: input, shape index: {}]
  %s3 = inlined_call_operand.hbm [shape: bf16[128,128], index: 3, kind: input, shape index: {}]
  %s4 = inlined_call_operand.vmem [shape: f32[1,128], index: 4, kind: input, shape index: {}]
  %s5 = inlined_call_operand.hbm [shape: bf16[128,256], index: 5, kind: input, shape index: {}]
  %s6 = inlined_call_operand.vmem [shape: f32[1,256], index: 6, kind: input, shape index: {}]
  %s7 = inlined_call_operand.hbm [shape: bf16[8,256], index: 7, kind: output, shape index: {}]
  %s8 = sld [smem:[#allocation0]]
  $region54: #{tpu_custom_call.1} parent=0
    _
  %s10 = ssub.s32 1, %s8
  %s11 = scalar_select 0, %s10, %s8
  $region1: #{tpu_custom_call.1} parent=0
    #allocation2 [shape = 'u8[2048]{0}', space=vmem, size = 0x800, scoped, tag = 'input window, operand 0, single buffered']
    #allocation3 [shape = 's32[1]{0}', space=sflag, size = 0x4, scoped, tag = 'scoped memory for tpu_custom_call.1']
    #allocation4 [shape = 's32[1]{0}', space=sflag, size = 0x4, scoped, tag = 'scoped memory for tpu_custom_call.1']
    #allocation5 [shape = 'u8[8192]{0}', space=vmem, size = 0x2000, scoped, tag = 'input window, operand 1, single buffered']
    #allocation6 [shape = 's32[1]{0}', space=sflag, size = 0x4, scoped, tag = 'scoped memory for tpu_custom_call.1']
    #allocation7 [shape = 'u8[32768]{0}', space=vmem, size = 0x8000, scoped, tag = 'input window, operand 3, single buffered']
    #allocation8 [shape = 'u8[65536]{0}', space=vmem, size = 0x10000, scoped, tag = 'input window, operand 5, single buffered']
    #allocation9 [shape = 's32[1]{0}', space=sflag, size = 0x4, scoped, tag = 'scoped memory for tpu_custom_call.1']
    #allocation10 [shape = 'u8[4096]{0}', space=vmem, size = 0x1000, scoped, tag = 'output window, operand 0, single buffered']
    %12 = vsyncpa [#allocation3], 0
    %13 = vsyncpa [#allocation6], 0
    %14 = vsyncpa [#allocation9], 0
    %15 = vsyncpa [#allocation4], 0
    // Predicated region
    $region2: #{tpu_custom_call.1} parent=1 // pred_check
      _
    $region3: #{tpu_custom_call.1} parent=1 // pred_check_branch
      %17 = sbr.rel (0) target = $region5
    $region4: #{tpu_custom_call.1} parent=1 // pred_region
      %s19 = ssub.s32 64, 64
      %20 = vsyncadd [#allocation3], %s19
      %s22 = sshll.u32 [#allocation2], 4
      %s23 = int_to_ptr.vmem [resolvable:$true] %s22
      %25 = dma.hbm_to_vmem [thread:$0]  %s0, 64, %s23, [#allocation3]
    $region5: #{tpu_custom_call.1} parent=1 // pred_fallthru
      _
    // Predicated region
    $region6: #{tpu_custom_call.1} parent=1 // pred_check
      _
    $region7: #{tpu_custom_call.1} parent=1 // pred_check_branch
      %27 = sbr.rel (0) target = $region9
    $region8: #{tpu_custom_call.1} parent=1 // pred_region
      %s29 = ssub.s32 256, 256
      %30 = vsyncadd [#allocation6], %s29
      %s31 = sshll.u32 [#allocation5], 4
      %s32 = int_to_ptr.vmem [resolvable:$true] %s31
      %37 = dma.hbm_to_vmem [thread:$0]  %s1, 256, %s32, [#allocation6], 64, 64, 4
    $region9: #{tpu_custom_call.1} parent=1 // pred_fallthru
      _
    // Predicated region
    $region10: #{tpu_custom_call.1} parent=1 // pred_check
      _
    $region11: #{tpu_custom_call.1} parent=1 // pred_check_branch
      %39 = sbr.rel (0) target = $region13
    $region12: #{tpu_custom_call.1} parent=1 // pred_region
      _
    $region13: #{tpu_custom_call.1} parent=1 // pred_fallthru
      _
    // Predicated region
    $region14: #{tpu_custom_call.1} parent=1 // pred_check
      _
    $region15: #{tpu_custom_call.1} parent=1 // pred_check_branch
      %41 = sbr.rel (0) target = $region17
    $region16: #{tpu_custom_call.1} parent=1 // pred_region
      %s43 = ssub.s32 1024, 1024
      %44 = vsyncadd [#allocation6], %s43
      %s45 = sshll.u32 [#allocation7], 4
      %s46 = int_to_ptr.vmem [resolvable:$true] %s45
      %51 = dma.hbm_to_vmem [thread:$0]  %s3, 1024, %s46, [#allocation6], 64, 64, 4
    $region17: #{tpu_custom_call.1} parent=1 // pred_fallthru
      _
    // Predicated region
    $region18: #{tpu_custom_call.1} parent=1 // pred_check
      _
    $region19: #{tpu_custom_call.1} parent=1 // pred_check_branch
      %53 = sbr.rel (0) target = $region21
    $region20: #{tpu_custom_call.1} parent=1 // pred_region
      _
    $region21: #{tpu_custom_call.1} parent=1 // pred_fallthru
      _
    // Predicated region
    $region22: #{tpu_custom_call.1} parent=1 // pred_check
      _
    $region23: #{tpu_custom_call.1} parent=1 // pred_check_branch
      %55 = sbr.rel (0) target = $region25
    $region24: #{tpu_custom_call.1} parent=1 // pred_region
      %s57 = ssub.s32 2048, 2048
      %58 = vsyncadd [#allocation9], %s57
      %s59 = sshll.u32 [#allocation8], 4
      %s60 = int_to_ptr.vmem [resolvable:$true] %s59
      %65 = dma.hbm_to_vmem [thread:$0]  %s5, 2048, %s60, [#allocation9], 128, 128, 8
    $region25: #{tpu_custom_call.1} parent=1 // pred_fallthru
      _
    // Predicated region
    $region26: #{tpu_custom_call.1} parent=1 // pred_check
      _
    $region27: #{tpu_custom_call.1} parent=1 // pred_check_branch
      %67 = sbr.rel (0) target = $region29
    $region28: #{tpu_custom_call.1} parent=1 // pred_region
      _
    $region29: #{tpu_custom_call.1} parent=1 // pred_fallthru
      _
    // Predicated region
    $region30: #{tpu_custom_call.1} parent=1 // pred_check
      _
    $region31: #{tpu_custom_call.1} parent=1 // pred_check_branch
      %69 = sbr.rel (0) target = $region33
    $region32: #{tpu_custom_call.1} parent=1 // pred_region
      %70 = dma.done [#allocation3], 64
    $region33: #{tpu_custom_call.1} parent=1 // pred_fallthru
      _
    // Predicated region
    $region34: #{tpu_custom_call.1} parent=1 // pred_check
      _
    $region35: #{tpu_custom_call.1} parent=1 // pred_check_branch
      %72 = sbr.rel (0) target = $region37
    $region36: #{tpu_custom_call.1} parent=1 // pred_region
      %73 = dma.done [#allocation6], 256
    $region37: #{tpu_custom_call.1} parent=1 // pred_fallthru
      _
    // Predicated region
    $region38: #{tpu_custom_call.1} parent=1 // pred_check
      _
    $region39: #{tpu_custom_call.1} parent=1 // pred_check_branch
      %75 = sbr.rel (0) target = $region41
    $region40: #{tpu_custom_call.1} parent=1 // pred_region
      %76 = dma.done [#allocation6], 1024
    $region41: #{tpu_custom_call.1} parent=1 // pred_fallthru
      _
    // Predicated region
    $region42: #{tpu_custom_call.1} parent=1 // pred_check
      _
    $region43: #{tpu_custom_call.1} parent=1 // pred_check_branch
      %78 = sbr.rel (0) target = $region45
    $region44: #{tpu_custom_call.1} parent=1 // pred_region
      %79 = dma.done [#allocation9], 2048
    $region45: #{tpu_custom_call.1} parent=1 // pred_fallthru
      _
    %v81 = vld [vmem:[#allocation2] sm:$0xf]
    %v82 = vld [vmem:[#allocation5] sm:$0xf]
    %v83 = vld [vmem:[#allocation5 + $0x4] sm:$0xf]
    %v84 = vld [vmem:[#allocation5 + $0x8] sm:$0xf]
    %v85 = vld [vmem:[#allocation5 + $0xc] sm:$0xf]
    %v86 = vld [vmem:[%s2] sm:$0x1]
    %v88 = vlaneseq
    %v89 = vshrl.u32 %v88, 7
    %v90 = vsub.s32 0, %v89
    %v91 = vrot.slane %v86, %v90
    %v97 = vunpack.c.l.b16 %v82
    %v98 = vunpack.c.l.b16 %v83
    %v99 = vunpack.c.l.b16 %v84
    %v100 = vunpack.c.l.b16 %v85
    %v101 = vpack.c.b16 %v98, %v97
    %v102 = vpack.c.b16 %v100, %v99
    %vm105 = vcmask 261120
    %v107 = vsel %vm105, %v81, 0
    %109 = vmatprep.subr.bf16.mxu0 0
    %110 = vmatpush1.bf16.msra.mxu0 0
    %111 = vmatprep.subr.bf16.mxu0 0
    %112 = vmatpush1.bf16.msra.mxu0 0
    %113 = vmatprep.subr.bf16.mxu0 0
    %114 = vmatpush1.bf16.msra.mxu0 0
    %115 = vmatprep.subr.bf16.mxu0 0
    %116 = vmatpush1.bf16.msra.mxu0 0
    %117 = vmatprep.subr.bf16.mxu0 0
    %118 = vmatpush1.bf16.msra.mxu0 0
    %119 = vmatprep.subr.bf16.mxu0 0
    %120 = vmatpush1.bf16.msra.mxu0 0
    %121 = vmatprep.subr.bf16.mxu0 0
    %122 = vmatpush1.bf16.msra.mxu0 %v102
    %123 = vmatprep.subr.bf16.mxu0 0
    %124 = vmatpush1.bf16.msra.mxu0 %v101
    %125 = vmatprep.subr.bf16.mxu0 0
    %126 = vmatpush2.bf16.msra.mxu0 0
    %127 = vmatprep.subr.bf16.mxu0 0
    %128 = vmatpush2.bf16.msra.mxu0 0
    %129 = vmatprep.subr.bf16.mxu0 0
    %130 = vmatpush2.bf16.msra.mxu0 0
    %131 = vmatprep.subr.bf16.mxu0 0
    %132 = vmatpush2.bf16.msra.mxu0 0
    %133 = vmatprep.subr.bf16.mxu0 0
    %134 = vmatpush2.bf16.msra.mxu0 0
    %135 = vmatprep.subr.bf16.mxu0 0
    %136 = vmatpush2.bf16.msra.mxu0 0
    %137 = vmatprep.subr.bf16.mxu0 0
    %138 = vmatpush2.bf16.msra.mxu0 0
    %139 = vmatprep.subr.bf16.mxu0 0
    %140 = vmatpush2.bf16.msra.mxu0 0
    %141 = vmatprep.mubr.bf16.mxu0 0
    %142 = vmatmul.mubr.bf16.gmra.mxu0 %v107
    %v143 = vpop.f32.mrf.mxu0
    %v144 = vadd.f32 %v91, %v143
    %v145 = vpop.f32.mrf.mxu0
    %v146 = vpop.f32.mrf.mxu0
    %v147 = vpop.f32.mrf.mxu0
    %148 = vdwg.mxu0
    %v149 = vmax.f32 %v144, 0.0
    %v150 = vpack.c.bf16 %v149, %v149
    %v151 = vld [vmem:[#allocation7] sm:$0xf]
    %v152 = vld [vmem:[#allocation7 + $0x4] sm:$0xf]
    %v153 = vld [vmem:[#allocation7 + $0x8] sm:$0xf]
    %v154 = vld [vmem:[#allocation7 + $0xc] sm:$0xf]
    %v155 = vld [vmem:[#allocation7 + $0x10] sm:$0xf]
    %v156 = vld [vmem:[#allocation7 + $0x14] sm:$0xf]
    %v157 = vld [vmem:[#allocation7 + $0x18] sm:$0xf]
    %v158 = vld [vmem:[#allocation7 + $0x1c] sm:$0xf]
    %v159 = vld [vmem:[#allocation7 + $0x20] sm:$0xf]
    %v160 = vld [vmem:[#allocation7 + $0x24] sm:$0xf]
    %v161 = vld [vmem:[#allocation7 + $0x28] sm:$0xf]
    %v162 = vld [vmem:[#allocation7 + $0x2c] sm:$0xf]
    %v163 = vld [vmem:[#allocation7 + $0x30] sm:$0xf]
    %v164 = vld [vmem:[#allocation7 + $0x34] sm:$0xf]
    %v165 = vld [vmem:[#allocation7 + $0x38] sm:$0xf]
    %v166 = vld [vmem:[#allocation7 + $0x3c] sm:$0xf]
    %v167 = vld [vmem:[%s4] sm:$0x1]
    %v169 = vlaneseq
    %v170 = vshrl.u32 %v169, 7
    %v171 = vsub.s32 0, %v170
    %v172 = vrot.slane %v167, %v171
    %v190 = vunpack.c.l.b16 %v151
    %v191 = vunpack.c.l.b16 %v152
    %v192 = vunpack.c.l.b16 %v153
    %v193 = vunpack.c.l.b16 %v154
    %v194 = vunpack.c.l.b16 %v155
    %v195 = vunpack.c.l.b16 %v156
    %v196 = vunpack.c.l.b16 %v157
    %v197 = vunpack.c.l.b16 %v158
    %v198 = vunpack.c.l.b16 %v159
    %v199 = vunpack.c.l.b16 %v160
    %v200 = vunpack.c.l.b16 %v161
    %v201 = vunpack.c.l.b16 %v162
    %v202 = vunpack.c.l.b16 %v163
    %v203 = vunpack.c.l.b16 %v164
    %v204 = vunpack.c.l.b16 %v165
    %v205 = vunpack.c.l.b16 %v166
    %v206 = vpack.c.b16 %v191, %v190
    %v207 = vpack.c.b16 %v193, %v192
    %v208 = vpack.c.b16 %v195, %v194
    %v209 = vpack.c.b16 %v197, %v196
    %v210 = vpack.c.b16 %v199, %v198
    %v211 = vpack.c.b16 %v201, %v200
    %v212 = vpack.c.b16 %v203, %v202
    %v213 = vpack.c.b16 %v205, %v204
    %222 = vmatprep.subr.bf16.mxu0 0
    %223 = vmatpush1.bf16.msra.mxu0 %v213
    %224 = vmatprep.subr.bf16.mxu0 0
    %225 = vmatpush1.bf16.msra.mxu0 %v212
    %226 = vmatprep.subr.bf16.mxu0 0
    %227 = vmatpush1.bf16.msra.mxu0 %v211
    %228 = vmatprep.subr.bf16.mxu0 0
    %229 = vmatpush1.bf16.msra.mxu0 %v210
    %230 = vmatprep.subr.bf16.mxu0 0
    %231 = vmatpush1.bf16.msra.mxu0 %v209
    %232 = vmatprep.subr.bf16.mxu0 0
    %233 = vmatpush1.bf16.msra.mxu0 %v208
    %234 = vmatprep.subr.bf16.mxu0 0
    %235 = vmatpush1.bf16.msra.mxu0 %v207
    %236 = vmatprep.subr.bf16.mxu0 0
    %237 = vmatpush1.bf16.msra.mxu0 %v206
    %238 = vmatprep.subr.bf16.mxu0 0
    %239 = vmatpush2.bf16.msra.mxu0 0
    %240 = vmatprep.subr.bf16.mxu0 0
    %241 = vmatpush2.bf16.msra.mxu0 0
    %242 = vmatprep.subr.bf16.mxu0 0
    %243 = vmatpush2.bf16.msra.mxu0 0
    %244 = vmatprep.subr.bf16.mxu0 0
    %245 = vmatpush2.bf16.msra.mxu0 0
    %246 = vmatprep.subr.bf16.mxu0 0
    %247 = vmatpush2.bf16.msra.mxu0 0
    %248 = vmatprep.subr.bf16.mxu0 0
    %249 = vmatpush2.bf16.msra.mxu0 0
    %250 = vmatprep.subr.bf16.mxu0 0
    %251 = vmatpush2.bf16.msra.mxu0 0
    %252 = vmatprep.subr.bf16.mxu0 0
    %253 = vmatpush2.bf16.msra.mxu0 0
    %254 = vmatprep.mubr.bf16.mxu0 0
    %255 = vmatmul.mubr.bf16.gmra.mxu0 %v150
    %v256 = vpop.f32.mrf.mxu0
    %v257 = vadd.f32 %v172, %v256
    %v258 = vpop.f32.mrf.mxu0
    %v259 = vpop.f32.mrf.mxu0
    %v260 = vpop.f32.mrf.mxu0
    %261 = vdwg.mxu0
    %v262 = vmax.f32 %v257, 0.0
    %v263 = vpack.c.bf16 %v262, %v262
    %v264 = vld [vmem:[#allocation8] sm:$0xf]
    %v265 = vld [vmem:[#allocation8 + $0x8] sm:$0xf]
    %v266 = vld [vmem:[#allocation8 + $0x10] sm:$0xf]
    %v267 = vld [vmem:[#allocation8 + $0x18] sm:$0xf]
    %v268 = vld [vmem:[#allocation8 + $0x20] sm:$0xf]
    %v269 = vld [vmem:[#allocation8 + $0x28] sm:$0xf]
    %v270 = vld [vmem:[#allocation8 + $0x30] sm:$0xf]
    %v271 = vld [vmem:[#allocation8 + $0x38] sm:$0xf]
    %v272 = vld [vmem:[#allocation8 + $0x40] sm:$0xf]
    %v273 = vld [vmem:[#allocation8 + $0x48] sm:$0xf]
    %v274 = vld [vmem:[#allocation8 + $0x50] sm:$0xf]
    %v275 = vld [vmem:[#allocation8 + $0x58] sm:$0xf]
    %v276 = vld [vmem:[#allocation8 + $0x60] sm:$0xf]
    %v277 = vld [vmem:[#allocation8 + $0x68] sm:$0xf]
    %v278 = vld [vmem:[#allocation8 + $0x70] sm:$0xf]
    %v279 = vld [vmem:[#allocation8 + $0x78] sm:$0xf]
    %v280 = vld [vmem:[%s6] sm:$0x1]
    %v282 = vlaneseq
    %v283 = vshrl.u32 %v282, 7
    %v284 = vsub.s32 0, %v283
    %v285 = vrot.slane %v280, %v284
    %v303 = vunpack.c.l.b16 %v264
    %v304 = vunpack.c.l.b16 %v265
    %v305 = vunpack.c.l.b16 %v266
    %v306 = vunpack.c.l.b16 %v267
    %v307 = vunpack.c.l.b16 %v268
    %v308 = vunpack.c.l.b16 %v269
    %v309 = vunpack.c.l.b16 %v270
    %v310 = vunpack.c.l.b16 %v271
    %v311 = vunpack.c.l.b16 %v272
    %v312 = vunpack.c.l.b16 %v273
    %v313 = vunpack.c.l.b16 %v274
    %v314 = vunpack.c.l.b16 %v275
    %v315 = vunpack.c.l.b16 %v276
    %v316 = vunpack.c.l.b16 %v277
    %v317 = vunpack.c.l.b16 %v278
    %v318 = vunpack.c.l.b16 %v279
    %v319 = vpack.c.b16 %v304, %v303
    %v320 = vpack.c.b16 %v306, %v305
    %v321 = vpack.c.b16 %v308, %v307
    %v322 = vpack.c.b16 %v310, %v309
    %v323 = vpack.c.b16 %v312, %v311
    %v324 = vpack.c.b16 %v314, %v313
    %v325 = vpack.c.b16 %v316, %v315
    %v326 = vpack.c.b16 %v318, %v317
    %335 = vmatprep.subr.bf16.mxu0 0
    %336 = vmatpush1.bf16.msra.mxu0 %v326
    %337 = vmatprep.subr.bf16.mxu0 0
    %338 = vmatpush1.bf16.msra.mxu0 %v325
    %339 = vmatprep.subr.bf16.mxu0 0
    %340 = vmatpush1.bf16.msra.mxu0 %v324
    %341 = vmatprep.subr.bf16.mxu0 0
    %342 = vmatpush1.bf16.msra.mxu0 %v323
    %343 = vmatprep.subr.bf16.mxu0 0
    %344 = vmatpush1.bf16.msra.mxu0 %v322
    %345 = vmatprep.subr.bf16.mxu0 0
    %346 = vmatpush1.bf16.msra.mxu0 %v321
    %347 = vmatprep.subr.bf16.mxu0 0
    %348 = vmatpush1.bf16.msra.mxu0 %v320
    %349 = vmatprep.subr.bf16.mxu0 0
    %350 = vmatpush1.bf16.msra.mxu0 %v319
    %351 = vmatprep.subr.bf16.mxu0 0
    %352 = vmatpush2.bf16.msra.mxu0 0
    %353 = vmatprep.subr.bf16.mxu0 0
    %354 = vmatpush2.bf16.msra.mxu0 0
    %355 = vmatprep.subr.bf16.mxu0 0
    %356 = vmatpush2.bf16.msra.mxu0 0
    %357 = vmatprep.subr.bf16.mxu0 0
    %358 = vmatpush2.bf16.msra.mxu0 0
    %359 = vmatprep.subr.bf16.mxu0 0
    %360 = vmatpush2.bf16.msra.mxu0 0
    %361 = vmatprep.subr.bf16.mxu0 0
    %362 = vmatpush2.bf16.msra.mxu0 0
    %363 = vmatprep.subr.bf16.mxu0 0
    %364 = vmatpush2.bf16.msra.mxu0 0
    %365 = vmatprep.subr.bf16.mxu0 0
    %366 = vmatpush2.bf16.msra.mxu0 0
    %367 = vmatprep.mubr.bf16.mxu0 0
    %368 = vmatmul.mubr.bf16.gmra.mxu0 %v263
    %v369 = vpop.f32.mrf.mxu0
    %v370 = vadd.f32 %v285, %v369
    %v371 = vpop.f32.mrf.mxu0
    %v372 = vpop.f32.mrf.mxu0
    %v373 = vpop.f32.mrf.mxu0
    %374 = vdwg.mxu0
    %vm375 = vcmask 523264
    %v376 = vsel %vm375, %v370, -inf
    %377 = vmax.xlane.f32.xlu0 %v376
    %v378 = vpop.xlane.xlu0 %377
    %vm379 = vcmask 1048064
    %v380 = vsel %vm379, %v370, -inf
    %381 = vmax.xlane.f32.xlu0 %v380
    %v382 = vpop.xlane.xlu0 %381
    %v383 = vsel %vm375, %v378, %v382
    %v384 = vsub.f32 %v370, %v383
    %v385 = vmul.f32 %v384, 1.442695
    %v386 = vpow.pop %v385
    %v387 = vsel %vm375, %v386, 0.0
    %388 = vadd.xlane.f32.xlu0 %v387
    %v389 = vpop.xlane.xlu0 %388
    %v390 = vrcp.pop %v389
    %v391 = vmul.f32 1.0, %v390
    %393 = vrot.lane.b32.xlu0 %v386, 64
    %v394 = vpop.permute.xlu0 %393
    %v396 = vsel %vm375, %v394, 0.0
    %397 = vadd.xlane.f32.xlu0 %v396
    %v398 = vpop.xlane.xlu0 %397
    %v399 = vrcp.pop %v398
    %v400 = vmul.f32 1.0, %v399
    %v401 = vsel %vm375, %v391, %v400
    %v402 = vmul.f32 %v386, %v401
    %v403 = vpack.c.bf16 %v402, %v402
    %404 = vst [vmem:[#allocation10] sm:$0xf] %v403
    %v405 = vld [vmem:[#allocation8 + $0x4] sm:$0xf]
    %v406 = vld [vmem:[#allocation8 + $0xc] sm:$0xf]
    %v407 = vld [vmem:[#allocation8 + $0x14] sm:$0xf]
    %v408 = vld [vmem:[#allocation8 + $0x1c] sm:$0xf]
    %v409 = vld [vmem:[#allocation8 + $0x24] sm:$0xf]
    %v410 = vld [vmem:[#allocation8 + $0x2c] sm:$0xf]
    %v411 = vld [vmem:[#allocation8 + $0x34] sm:$0xf]
    %v412 = vld [vmem:[#allocation8 + $0x3c] sm:$0xf]
    %v413 = vld [vmem:[#allocation8 + $0x44] sm:$0xf]
    %v414 = vld [vmem:[#allocation8 + $0x4c] sm:$0xf]
    %v415 = vld [vmem:[#allocation8 + $0x54] sm:$0xf]
    %v416 = vld [vmem:[#allocation8 + $0x5c] sm:$0xf]
    %v417 = vld [vmem:[#allocation8 + $0x64] sm:$0xf]
    %v418 = vld [vmem:[#allocation8 + $0x6c] sm:$0xf]
    %v419 = vld [vmem:[#allocation8 + $0x74] sm:$0xf]
    %v420 = vld [vmem:[#allocation8 + $0x7c] sm:$0xf]
    %v421 = vld [vmem:[%s6 + $0x1] sm:$0x1]
    %v423 = vlaneseq
    %v424 = vshrl.u32 %v423, 7
    %v425 = vsub.s32 0, %v424
    %v426 = vrot.slane %v421, %v425
    %v444 = vunpack.c.l.b16 %v405
    %v445 = vunpack.c.l.b16 %v406
    %v446 = vunpack.c.l.b16 %v407
    %v447 = vunpack.c.l.b16 %v408
    %v448 = vunpack.c.l.b16 %v409
    %v449 = vunpack.c.l.b16 %v410
    %v450 = vunpack.c.l.b16 %v411
    %v451 = vunpack.c.l.b16 %v412
    %v452 = vunpack.c.l.b16 %v413
    %v453 = vunpack.c.l.b16 %v414
    %v454 = vunpack.c.l.b16 %v415
    %v455 = vunpack.c.l.b16 %v416
    %v456 = vunpack.c.l.b16 %v417
    %v457 = vunpack.c.l.b16 %v418
    %v458 = vunpack.c.l.b16 %v419
    %v459 = vunpack.c.l.b16 %v420
    %v460 = vpack.c.b16 %v445, %v444
    %v461 = vpack.c.b16 %v447, %v446
    %v462 = vpack.c.b16 %v449, %v448
    %v463 = vpack.c.b16 %v451, %v450
    %v464 = vpack.c.b16 %v453, %v452
    %v465 = vpack.c.b16 %v455, %v454
    %v466 = vpack.c.b16 %v457, %v456
    %v467 = vpack.c.b16 %v459, %v458
    %476 = vmatprep.subr.bf16.mxu0 0
    %477 = vmatpush1.bf16.msra.mxu0 %v467
    %478 = vmatprep.subr.bf16.mxu0 0
    %479 = vmatpush1.bf16.msra.mxu0 %v466
    %480 = vmatprep.subr.bf16.mxu0 0
    %481 = vmatpush1.bf16.msra.mxu0 %v465
    %482 = vmatprep.subr.bf16.mxu0 0
    %483 = vmatpush1.bf16.msra.mxu0 %v464
    %484 = vmatprep.subr.bf16.mxu0 0
    %485 = vmatpush1.bf16.msra.mxu0 %v463
    %486 = vmatprep.subr.bf16.mxu0 0
    %487 = vmatpush1.bf16.msra.mxu0 %v462
    %488 = vmatprep.subr.bf16.mxu0 0
    %489 = vmatpush1.bf16.msra.mxu0 %v461
    %490 = vmatprep.subr.bf16.mxu0 0
    %491 = vmatpush1.bf16.msra.mxu0 %v460
    %492 = vmatprep.subr.bf16.mxu0 0
    %493 = vmatpush2.bf16.msra.mxu0 0
    %494 = vmatprep.subr.bf16.mxu0 0
    %495 = vmatpush2.bf16.msra.mxu0 0
    %496 = vmatprep.subr.bf16.mxu0 0
    %497 = vmatpush2.bf16.msra.mxu0 0
    %498 = vmatprep.subr.bf16.mxu0 0
    %499 = vmatpush2.bf16.msra.mxu0 0
    %500 = vmatprep.subr.bf16.mxu0 0
    %501 = vmatpush2.bf16.msra.mxu0 0
    %502 = vmatprep.subr.bf16.mxu0 0
    %503 = vmatpush2.bf16.msra.mxu0 0
    %504 = vmatprep.subr.bf16.mxu0 0
    %505 = vmatpush2.bf16.msra.mxu0 0
    %506 = vmatprep.subr.bf16.mxu0 0
    %507 = vmatpush2.bf16.msra.mxu0 0
    %508 = vmatprep.mubr.bf16.mxu0 0
    %509 = vmatmul.mubr.bf16.gmra.mxu0 %v263
    %v510 = vpop.f32.mrf.mxu0
    %v511 = vadd.f32 %v426, %v510
    %v512 = vpop.f32.mrf.mxu0
    %v513 = vpop.f32.mrf.mxu0
    %v514 = vpop.f32.mrf.mxu0
    %515 = vdwg.mxu0
    %v516 = vsel %vm375, %v511, -inf
    %517 = vmax.xlane.f32.xlu0 %v516
    %v518 = vpop.xlane.xlu0 %517
    %v519 = vsel %vm379, %v511, -inf
    %520 = vmax.xlane.f32.xlu0 %v519
    %v521 = vpop.xlane.xlu0 %520
    %v522 = vsel %vm375, %v518, %v521
    %v523 = vsub.f32 %v511, %v522
    %v524 = vmul.f32 %v523, 1.442695
    %v525 = vpow.pop %v524
    %v526 = vsel %vm375, %v525, 0.0
    %527 = vadd.xlane.f32.xlu0 %v526
    %v528 = vpop.xlane.xlu0 %527
    %v529 = vrcp.pop %v528
    %v530 = vmul.f32 1.0, %v529
    %532 = vrot.lane.b32.xlu0 %v525, 64
    %v533 = vpop.permute.xlu0 %532
    %v535 = vsel %vm375, %v533, 0.0
    %536 = vadd.xlane.f32.xlu0 %v535
    %v537 = vpop.xlane.xlu0 %536
    %v538 = vrcp.pop %v537
    %v539 = vmul.f32 1.0, %v538
    %v540 = vsel %vm375, %v530, %v539
    %v541 = vmul.f32 %v525, %v540
    %v542 = vpack.c.bf16 %v541, %v541
    %543 = vst [vmem:[#allocation10 + $0x4] sm:$0xf] %v542
    // Predicated region
    $region46: #{tpu_custom_call.1} parent=1 // pred_check
      _
    $region47: #{tpu_custom_call.1} parent=1 // pred_check_branch
      %545 = sbr.rel (0) target = $region49
    $region48: #{tpu_custom_call.1} parent=1 // pred_region
      %s547 = ssub.s32 128, 128
      %548 = vsyncadd [#allocation4], %s547
      %s550 = sshll.u32 [#allocation10], 4
      %s551 = int_to_ptr.vmem [resolvable:$true] %s550
      %553 = dma.vmem_to_hbm [thread:$0]  %s551, 128, %s7, [#allocation4]
    $region49: #{tpu_custom_call.1} parent=1 // pred_fallthru
      _
    // Predicated region
    $region50: #{tpu_custom_call.1} parent=1 // pred_check
      _
    $region51: #{tpu_custom_call.1} parent=1 // pred_check_branch
      %555 = sbr.rel (0) target = $region53
    $region52: #{tpu_custom_call.1} parent=1 // pred_region
      %556 = dma.done [#allocation4], 128
    $region53: #{tpu_custom_call.1} parent=1 // pred_fallthru
      _
    %557 = vsyncpa [#allocation3], 1
    %558 = vsyncpa [#allocation6], 1
    %559 = vsyncpa [#allocation9], 1
    %560 = vsyncpa [#allocation4], 1

</llo_original>
